<compile_context>
chip_gen: v6e
topology: v6e:2x2x1
jax: 0.10.0
libtpu: 0.0.40
codegen_flags: <defaults>
</compile_context>

<pallas_src>
import jax
import jax.numpy as jnp
from jax.experimental import pallas as pl
from jax.experimental.pallas import tpu as pltpu

INPUT_DIM = 10
HID1 = 16
HID2 = 32
OUTPUT_DIM = 1
BN_EPS = 1e-5


def dense_kernel(x_ref, w1_ref, b1_ref, w2_ref, b2_ref, w3_ref, b3_ref, o_ref):
    # x_ref: (INPUT_DIM, TILE_N) bf16 -- batch on the 128-wide lane axis, so all
    # intermediates are lane-dense (features, batch) slabs and stores are unmasked.
    x = x_ref[...]

    # Linear(10 -> 16) [with BatchNorm folded in] + ReLU.  bf16 x bf16 -> f32 MXU.
    h = jnp.dot(w1_ref[...], x, preferred_element_type=jnp.float32)
    h = jnp.maximum(h + b1_ref[...], 0.0)               # (HID1, TILE_N) f32

    # Linear(16 -> 32) + ReLU.  Intermediates stay f32: dropping the bf16
    # round-trips removes one VPU pass per result vreg and avoids bf16
    # pack/unpack on v5e, while the MXU has huge headroom at K<=32.
    h = jnp.dot(w2_ref[...], h, preferred_element_type=jnp.float32)
    h = jnp.maximum(h + b2_ref[...], 0.0)               # (HID2, TILE_N) f32

    # Linear(32 -> 1)
    o = jnp.dot(w3_ref[...], h, preferred_element_type=jnp.float32) + b3_ref[...]
    o_ref[...] = o.astype(o_ref.dtype)                  # (OUTPUT_DIM, TILE_N)


def _round_up(n, m):
    return ((n + m - 1) // m) * m


def _pick_tile(n, tile_n):
    """Choose the batch (lane-axis) tile.

    Auto mode aims for ~8 grid steps (keeps v7x's 2 TCs busy and DMA/compute
    overlapped) while making blocks large enough that HBM bandwidth, not the
    ~0.35us per-step overhead, limits the kernel.  Cap at 64K lanes: the
    (10, tile) bf16 input + (1, tile) f32 output blocks cost ~64 B/lane in VMEM
    (sublane-padded), i.e. ~8 MiB double-buffered -- inside the scoped-VMEM
    default on v5e (16 MiB) and v6e/v7x (32 MiB).
    """
    if tile_n is None:
        tile_n = pl.cdiv(n, 8)
    tile = _round_up(max(int(tile_n), 128), 128)
    tile = min(tile, 65536, _round_up(n, 128))
    return tile


def dense_model_forward(x, params, *, tile_n=None, x_is_feature_major=False):
    """Eval-mode DenseModel forward.

    x: (N, INPUT_DIM) float32 (PyTorch layout).  To skip the single staging
       transpose+cast pass, plumb x upstream in feature-major layout and pass
       x of shape (INPUT_DIM, N) (bf16 preferred) with x_is_feature_major=True.
    Returns (N, OUTPUT_DIM) float32.
    """
    # ---- Fold eval-mode BatchNorm1d into the first Linear (exact). ----
    scale = params["gamma"] * jax.lax.rsqrt(params["running_var"] + BN_EPS)  # (IN,)
    shift = params["beta"] - params["running_mean"] * scale                  # (IN,)
    w1f = (params["w1"] * scale[None, :]).astype(jnp.bfloat16)               # (H1, IN)
    b1f = (params["b1"] + params["w1"] @ shift).reshape(HID1, 1)             # f32
    w2 = params["w2"].astype(jnp.float32)
    b2 = params["b2"].reshape(HID2, 1).astype(jnp.float32)
    w3 = params["w3"].astype(jnp.float32)
    b3 = params["b3"].reshape(OUTPUT_DIM, 1).astype(jnp.float32)

    # ---- Batch-on-lanes input layout: (INPUT_DIM, N) bf16. ----
    if x_is_feature_major:
        n = x.shape[1]
        xt = x.astype(jnp.bfloat16)          # no-op if already bf16
    else:
        n = x.shape[0]
        xt = x.T.astype(jnp.bfloat16)        # single fused transpose+cast, no pad

    tile = _pick_tile(n, tile_n)
    grid = (pl.cdiv(n, tile),)               # ragged edge block handled by Pallas

    def batch_map(i):
        return (0, i)

    def resident_map(i):                     # same block every step -> stays in VMEM
        return (0, 0)

    out = pl.pallas_call(
        dense_kernel,
        out_shape=jax.ShapeDtypeStruct((OUTPUT_DIM, n), jnp.float32),
        grid=grid,
        in_specs=[
            pl.BlockSpec((INPUT_DIM, tile), batch_map),
            pl.BlockSpec((HID1, INPUT_DIM), resident_map),
            pl.BlockSpec((HID1, 1), resident_map),
            pl.BlockSpec((HID2, HID1), resident_map),
            pl.BlockSpec((HID2, 1), resident_map),
            pl.BlockSpec((OUTPUT_DIM, HID2), resident_map),
            pl.BlockSpec((OUTPUT_DIM, 1), resident_map),
        ],
        out_specs=pl.BlockSpec((OUTPUT_DIM, tile), batch_map),
        compiler_params=pltpu.CompilerParams(
            dimension_semantics=("parallel",)),
    )(xt, w1f, b1f, w2, b2, w3, b3)

    # (1, N) row-major -> (N, 1): pure reshape (OUTPUT_DIM == 1), no data movement.
    return out.reshape(n, OUTPUT_DIM)


def init_params(key):
    """Deterministic parameter init mimicking PyTorch defaults (weights stored (out, in))."""
    ks = jax.random.split(key, 6)

    def linear_init(kw, kb, fan_in, fan_out):
        bound = 1.0 / (fan_in ** 0.5)
        w = jax.random.uniform(kw, (fan_out, fan_in), jnp.float32, -bound, bound)
        b = jax.random.uniform(kb, (fan_out,), jnp.float32, -bound, bound)
        return w, b

    w1, b1 = linear_init(ks[0], ks[1], INPUT_DIM, HID1)
    w2, b2 = linear_init(ks[2], ks[3], HID1, HID2)
    w3, b3 = linear_init(ks[4], ks[5], HID2, OUTPUT_DIM)

    return {
        # BatchNorm1d defaults: gamma=1, beta=0, running_mean=0, running_var=1
        "gamma": jnp.ones((INPUT_DIM,), jnp.float32),
        "beta": jnp.zeros((INPUT_DIM,), jnp.float32),
        "running_mean": jnp.zeros((INPUT_DIM,), jnp.float32),
        "running_var": jnp.ones((INPUT_DIM,), jnp.float32),
        "w1": w1, "b1": b1,
        "w2": w2, "b2": b2,
        "w3": w3, "b3": b3,
    }


def reference_forward(x, p):
    """Pure-JAX reference with the same quantization points as the kernel
    (x and the BN-folded w1 in bf16, everything else f32)."""
    scale = p["gamma"] * jax.lax.rsqrt(p["running_var"] + BN_EPS)
    shift = p["beta"] - p["running_mean"] * scale
    w1f = (p["w1"] * scale[None, :]).astype(jnp.bfloat16).astype(jnp.float32)
    b1f = p["b1"] + p["w1"] @ shift

    xq = x.astype(jnp.bfloat16).astype(jnp.float32)
    h = jnp.maximum(xq @ w1f.T + b1f, 0.0)
    h = jnp.maximum(h @ p["w2"].T + p["b2"], 0.0)
    return h @ p["w3"].T + p["b3"]


if __name__ == "__main__":
    key = jax.random.PRNGKey(0)
    k_x, k_p = jax.random.split(key)
    params = init_params(k_p)

    fwd = jax.jit(dense_model_forward,
                  static_argnames=("tile_n", "x_is_feature_major"))

    # Small test: batch deliberately NOT a multiple of 128, explicit small tile
    # so the grid has several steps plus a ragged edge (partial) block.
    batch = 300
    x = jax.random.normal(k_x, (batch, INPUT_DIM), jnp.float32)
    out = jax.block_until_ready(fwd(x, params, tile_n=128))
    ref = reference_forward(x, params)
    assert out.shape == (batch, OUTPUT_DIM), out.shape
    assert jnp.allclose(out, ref, atol=1e-2, rtol=1e-2), (
        float(jnp.max(jnp.abs(out - ref))))

    # Auto-tile path (grid of ~8 steps), still small and quick.
    batch2 = 2048
    x2 = jax.random.normal(k_x, (batch2, INPUT_DIM), jnp.float32)
    out2 = jax.block_until_ready(fwd(x2, params))
    ref2 = reference_forward(x2, params)
    assert out2.shape == (batch2, OUTPUT_DIM), out2.shape
    assert jnp.allclose(out2, ref2, atol=1e-2, rtol=1e-2), (
        float(jnp.max(jnp.abs(out2 - ref2))))

    print("KERNEL_OK")
</pallas_src>

<mosaic_0001>
module attributes {stable_mosaic.version = 11 : i64} {
  func.func @dense_kernel(%arg0: i32, %arg1: memref<10x128xbf16, #tpu.memory_space<vmem>>, %arg2: memref<16x10xbf16, #tpu.memory_space<vmem>>, %arg3: memref<16x1xf32, #tpu.memory_space<vmem>>, %arg4: memref<32x16xf32, #tpu.memory_space<vmem>>, %arg5: memref<32x1xf32, #tpu.memory_space<vmem>>, %arg6: memref<1x32xf32, #tpu.memory_space<vmem>>, %arg7: memref<1x1xf32, #tpu.memory_space<vmem>>, %arg8: memref<1x128xf32, #tpu.memory_space<vmem>>) attributes {dimension_semantics = [#tpu.dimension_semantics<parallel>], iteration_bounds = array<i64: 3>, scalar_prefetch = 0 : i64, scratch_operands = 0 : i64, tpu.core_type = #tpu.core_type<tc>, window_params = [{transform_indices = @transform_0, window_bounds = array<i64: 10, 128>}, {pipeline_mode = #tpu.pipeline_mode<synchronous>, transform_indices = @transform_1, window_bounds = array<i64: 16, 10>}, {pipeline_mode = #tpu.pipeline_mode<synchronous>, transform_indices = @transform_2, window_bounds = array<i64: 16, 1>}, {pipeline_mode = #tpu.pipeline_mode<synchronous>, transform_indices = @transform_3, window_bounds = array<i64: 32, 16>}, {pipeline_mode = #tpu.pipeline_mode<synchronous>, transform_indices = @transform_4, window_bounds = array<i64: 32, 1>}, {pipeline_mode = #tpu.pipeline_mode<synchronous>, transform_indices = @transform_5, window_bounds = array<i64: 1, 32>}, {pipeline_mode = #tpu.pipeline_mode<synchronous>, transform_indices = @transform_6, window_bounds = array<i64: 1, 1>}, {transform_indices = @transform_7, window_bounds = array<i64: 1, 128>}]} {
    %c0 = arith.constant 0 : index
    %c0_0 = arith.constant 0 : index
    %0 = vector.load %arg1[%c0, %c0_0] : memref<10x128xbf16, #tpu.memory_space<vmem>>, vector<10x128xbf16>
    %c0_1 = arith.constant 0 : index
    %c0_2 = arith.constant 0 : index
    %1 = vector.load %arg2[%c0_1, %c0_2] : memref<16x10xbf16, #tpu.memory_space<vmem>>, vector<16x10xbf16>
    %cst = arith.constant dense<0.000000e+00> : vector<16x128xf32>
    %2 = tpu.matmul %1, %0, %cst {dimension_numbers = #tpu.dot_dimension_numbers<[1], [0], [0], [1], [0, 0, 1, 1], [], []>} : vector<16x10xbf16>, vector<10x128xbf16>, vector<16x128xf32> -> vector<16x128xf32>
    %c0_3 = arith.constant 0 : index
    %c0_4 = arith.constant 0 : index
    %3 = vector.load %arg3[%c0_3, %c0_4] : memref<16x1xf32, #tpu.memory_space<vmem>>, vector<16x1xf32>
    %4 = vector.broadcast %3 : vector<16x1xf32> to vector<16x128xf32>
    %5 = arith.addf %2, %4 : vector<16x128xf32>
    %cst_5 = arith.constant 0.000000e+00 : f32
    %6 = vector.broadcast %cst_5 : f32 to vector<16x128xf32>
    %7 = arith.maximumf %5, %6 : vector<16x128xf32>
    %c0_6 = arith.constant 0 : index
    %c0_7 = arith.constant 0 : index
    %8 = vector.load %arg4[%c0_6, %c0_7] : memref<32x16xf32, #tpu.memory_space<vmem>>, vector<32x16xf32>
    %cst_8 = arith.constant dense<0.000000e+00> : vector<32x128xf32>
    %9 = tpu.matmul %8, %7, %cst_8 {dimension_numbers = #tpu.dot_dimension_numbers<[1], [0], [0], [1], [0, 0, 1, 1], [], []>} : vector<32x16xf32>, vector<16x128xf32>, vector<32x128xf32> -> vector<32x128xf32>
    %c0_9 = arith.constant 0 : index
    %c0_10 = arith.constant 0 : index
    %10 = vector.load %arg5[%c0_9, %c0_10] : memref<32x1xf32, #tpu.memory_space<vmem>>, vector<32x1xf32>
    %11 = vector.broadcast %10 : vector<32x1xf32> to vector<32x128xf32>
    %12 = arith.addf %9, %11 : vector<32x128xf32>
    %cst_11 = arith.constant 0.000000e+00 : f32
    %13 = vector.broadcast %cst_11 : f32 to vector<32x128xf32>
    %14 = arith.maximumf %12, %13 : vector<32x128xf32>
    %c0_12 = arith.constant 0 : index
    %c0_13 = arith.constant 0 : index
    %15 = vector.load %arg6[%c0_12, %c0_13] : memref<1x32xf32, #tpu.memory_space<vmem>>, vector<1x32xf32>
    %cst_14 = arith.constant dense<0.000000e+00> : vector<1x128xf32>
    %16 = tpu.matmul %15, %14, %cst_14 {dimension_numbers = #tpu.dot_dimension_numbers<[1], [0], [0], [1], [0, 0, 1, 1], [], []>} : vector<1x32xf32>, vector<32x128xf32>, vector<1x128xf32> -> vector<1x128xf32>
    %c0_15 = arith.constant 0 : index
    %c0_16 = arith.constant 0 : index
    %17 = vector.load %arg7[%c0_15, %c0_16] : memref<1x1xf32, #tpu.memory_space<vmem>>, vector<1x1xf32>
    %18 = vector.broadcast %17 : vector<1x1xf32> to vector<1x128xf32>
    %19 = arith.addf %16, %18 : vector<1x128xf32>
    %c0_17 = arith.constant 0 : index
    %c0_18 = arith.constant 0 : index
    %20 = vector.load %arg8[%c0_17, %c0_18] : memref<1x128xf32, #tpu.memory_space<vmem>>, vector<1x128xf32>
    tpu.vector_store %arg8[%c0_17, %c0_18], %19 {strides = array<i32>} : memref<1x128xf32, #tpu.memory_space<vmem>>, vector<1x128xf32>,
    return
  }
  func.func @transform_0(%arg0: i32) -> (i32, i32) {
    %c0_i32 = arith.constant 0 : i32
    %c0_i32_0 = arith.constant 0 : i32
    return %c0_i32, %arg0 : i32, i32
  }
  func.func @transform_1(%arg0: i32) -> (i32, i32) {
    %c0_i32 = arith.constant 0 : i32
    %c0_i32_0 = arith.constant 0 : i32
    %c0_i32_1 = arith.constant 0 : i32
    return %c0_i32, %c0_i32_0 : i32, i32
  }
  func.func @transform_2(%arg0: i32) -> (i32, i32) {
    %c0_i32 = arith.constant 0 : i32
    %c0_i32_0 = arith.constant 0 : i32
    %c0_i32_1 = arith.constant 0 : i32
    return %c0_i32, %c0_i32_0 : i32, i32
  }
  func.func @transform_3(%arg0: i32) -> (i32, i32) {
    %c0_i32 = arith.constant 0 : i32
    %c0_i32_0 = arith.constant 0 : i32
    %c0_i32_1 = arith.constant 0 : i32
    return %c0_i32, %c0_i32_0 : i32, i32
  }
  func.func @transform_4(%arg0: i32) -> (i32, i32) {
    %c0_i32 = arith.constant 0 : i32
    %c0_i32_0 = arith.constant 0 : i32
    %c0_i32_1 = arith.constant 0 : i32
    return %c0_i32, %c0_i32_0 : i32, i32
  }
  func.func @transform_5(%arg0: i32) -> (i32, i32) {
    %c0_i32 = arith.constant 0 : i32
    %c0_i32_0 = arith.constant 0 : i32
    %c0_i32_1 = arith.constant 0 : i32
    return %c0_i32, %c0_i32_0 : i32, i32
  }
  func.func @transform_6(%arg0: i32) -> (i32, i32) {
    %c0_i32 = arith.constant 0 : i32
    %c0_i32_0 = arith.constant 0 : i32
    %c0_i32_1 = arith.constant 0 : i32
    return %c0_i32, %c0_i32_0 : i32, i32
  }
  func.func @transform_7(%arg0: i32) -> (i32, i32) {
    %c0_i32 = arith.constant 0 : i32
    %c0_i32_0 = arith.constant 0 : i32
    return %c0_i32, %arg0 : i32, i32
  }
}

</mosaic_0001>

<llo_original>
// kernel: dense_model_forward.1
$region0: #{dense_model_forward.1}
  #allocation0 [shape = 'u32[]', space=smem, size = 0x4, offset = 0x4, fixed_abs, tag = 'smem constant byte address 0x4 - core index']
  #allocation1 [shape = 'u32[144,128]{1,0:T(1,128)}', space=vmem, size = 0x12000, scoped, tag = 'internal scratch']
  #allocation2 [shape = 'f32[1,1]{1,0:T(1,128)S(1)}', space=vmem, size = 0x200, scoped, tag = 'scoped memory for dense_model_forward.1']
  %s0 = inlined_call_operand.vmem [shape: bf16[10,300], index: 0, kind: input, shape index: {}]
  %s1 = inlined_call_operand.vmem [shape: bf16[16,10], index: 1, kind: input, shape index: {}]
  %s2 = inlined_call_operand.vmem [shape: f32[16,1], index: 2, kind: input, shape index: {}]
  %s3 = inlined_call_operand.vmem [shape: f32[32,16], index: 3, kind: input, shape index: {}]
  %s4 = inlined_call_operand.vmem [shape: f32[32,1], index: 4, kind: input, shape index: {}]
  %s5 = inlined_call_operand.vmem [shape: f32[1,32], index: 5, kind: input, shape index: {}]
  %s6 = inlined_call_operand.<no memory space> [shape: f32[1,1], index: 6, kind: input, shape index: {}]
  %s7 = inlined_call_operand.hbm [shape: f32[1,300], index: 7, kind: output, shape index: {}]
  %s8 = sld [smem:[#allocation0]]
  $region102: #{dense_model_forward.1} parent=0
    _
  %s10 = ssub.s32 1, %s8
  %s11 = scalar_select 0, %s10, %s8
  %v12 = vstv %s6
  %13 = vst [vmem:[#allocation2] sm:$0x1] %v12
  $region1: #{dense_model_forward.1} parent=0
    #allocation3 [shape = 'u8[8192]{0}', space=vmem, size = 0x2000, scoped, tag = 'input window, operand 0']
    #allocation4 [shape = 'u8[1024]{0}', space=vmem, size = 0x400, scoped, tag = 'output window, operand 0']
    #allocation5 [shape = 's32[2]{0}', space=sflag, size = 0x8, scoped, tag = 'scoped memory for dense_model_forward.1']
    %14 = vsyncpa [#allocation5], 0
    %s15 = scalar_lea.sflag [#allocation5], 1
    %16 = vsyncpa %s15, 0
    loop: start=0, step=1, limit=5
    $region2: #{dense_model_forward.1} parent=1 // loop_pre_header
      _
    $region3: #{dense_model_forward.1} parent=1 // loop_header
      %s18 = sphi 0, %s22
      %p19 = scmp.ge.s32.totalorder %s18, 5
      %s28 = sphi 0, %s30
      %s31 = sphi 0, %s28
      %s32 = sphi 0, %s31
      %s48 = sphi 0, %s32
      %s52 = sphi 0, %s52
      %s54 = sphi 0, %s52
      %s55 = sphi 0, %s54
      %s69 = sphi 0, %s55
      %s73 = sphi 0, %s73
      %s75 = sphi 0, %s73
      %s76 = sphi 0, %s75
      %s90 = sphi 0, %s76
      %s94 = sphi 0, %s94
      %s96 = sphi 0, %s94
      %s97 = sphi 0, %s96
      %s111 = sphi 0, %s97
      %s115 = sphi 0, %s115
      %s117 = sphi 0, %s115
      %s118 = sphi 0, %s117
      %s132 = sphi 0, %s118
      %s136 = sphi 0, %s136
      %s138 = sphi 0, %s136
      %s139 = sphi 0, %s138
      %s153 = sphi 0, %s139
      %s157 = sphi 0, %s157
      %s159 = sphi 0, %s157
      %s160 = sphi 0, %s159
      %s174 = sphi 0, %s160
      %s180 = sphi 0, %s182
      %s183 = sphi 0, %s180
      %s184 = sphi 0, %s183
      %s200 = sphi 0, %s184
    $region4: #{dense_model_forward.1} parent=1 // loop_header_branch
      %21 = sbr.rel (%p19) target = $region8
    $region5: #{dense_model_forward.1} parent=1 // loop_body
      %s23 = ssub.s32 %s18, 1
      %s24 = ssub.s32 %s18, 2
      %s25 = sadd.s32 %s18, 1
      %s26 = ssub.s32 %s18, %s25
      %p27 = scmp.eq.s32.totalorder %s26, 0
      %s29 = sadd.s32 %s28, 1
      %s30 = scalar_select %p27, %s28, %s29
      %p33 = pneg %p27
      %p34 = scmp.eq.s32.totalorder %s18, 2
      %p35 = por %p33, %p34
      %p36 = scmp.ne.s32.totalorder %s28, %s31
      %p37 = scmp.eq.s32.totalorder %s18, 0
      %p38 = por %p36, %p37
      %p39 = scmp.ne.s32.totalorder %s28, %s31
      %p40 = scmp.eq.s32.totalorder %s23, 2
      %p41 = por %p39, %p40
      %p42 = scmp.ne.s32.totalorder %s31, %s32
      %p43 = scmp.eq.s32.totalorder %s23, 0
      %p44 = por %p42, %p43
      %p45 = scmp.ne.s32.totalorder %s31, %s32
      %p46 = scmp.eq.s32.totalorder %s24, 2
      %p47 = por %p45, %p46
      %p49 = scmp.ne.s32.totalorder %s32, %s48
      %p50 = scmp.eq.s32.totalorder %s24, 0
      %p51 = por %p49, %p50
      %s53 = sadd.s32 %s52, 1
      %p56 = scmp.eq.s32.totalorder %s18, 2
      %p57 = scmp.ne.s32.totalorder %s52, %s54
      %p58 = scmp.eq.s32.totalorder %s18, 0
      %p59 = por %p57, %p58
      %p60 = scmp.ne.s32.totalorder %s52, %s54
      %p61 = scmp.eq.s32.totalorder %s23, 2
      %p62 = por %p60, %p61
      %p63 = scmp.ne.s32.totalorder %s54, %s55
      %p64 = scmp.eq.s32.totalorder %s23, 0
      %p65 = por %p63, %p64
      %p66 = scmp.ne.s32.totalorder %s54, %s55
      %p67 = scmp.eq.s32.totalorder %s24, 2
      %p68 = por %p66, %p67
      %p70 = scmp.ne.s32.totalorder %s55, %s69
      %p71 = scmp.eq.s32.totalorder %s24, 0
      %p72 = por %p70, %p71
      %s74 = sadd.s32 %s73, 1
      %p77 = scmp.eq.s32.totalorder %s18, 2
      %p78 = scmp.ne.s32.totalorder %s73, %s75
      %p79 = scmp.eq.s32.totalorder %s18, 0
      %p80 = por %p78, %p79
      %p81 = scmp.ne.s32.totalorder %s73, %s75
      %p82 = scmp.eq.s32.totalorder %s23, 2
      %p83 = por %p81, %p82
      %p84 = scmp.ne.s32.totalorder %s75, %s76
      %p85 = scmp.eq.s32.totalorder %s23, 0
      %p86 = por %p84, %p85
      %p87 = scmp.ne.s32.totalorder %s75, %s76
      %p88 = scmp.eq.s32.totalorder %s24, 2
      %p89 = por %p87, %p88
      %p91 = scmp.ne.s32.totalorder %s76, %s90
      %p92 = scmp.eq.s32.totalorder %s24, 0
      %p93 = por %p91, %p92
      %s95 = sadd.s32 %s94, 1
      %p98 = scmp.eq.s32.totalorder %s18, 2
      %p99 = scmp.ne.s32.totalorder %s94, %s96
      %p100 = scmp.eq.s32.totalorder %s18, 0
      %p101 = por %p99, %p100
      %p102 = scmp.ne.s32.totalorder %s94, %s96
      %p103 = scmp.eq.s32.totalorder %s23, 2
      %p104 = por %p102, %p103
      %p105 = scmp.ne.s32.totalorder %s96, %s97
      %p106 = scmp.eq.s32.totalorder %s23, 0
      %p107 = por %p105, %p106
      %p108 = scmp.ne.s32.totalorder %s96, %s97
      %p109 = scmp.eq.s32.totalorder %s24, 2
      %p110 = por %p108, %p109
      %p112 = scmp.ne.s32.totalorder %s97, %s111
      %p113 = scmp.eq.s32.totalorder %s24, 0
      %p114 = por %p112, %p113
      %s116 = sadd.s32 %s115, 1
      %p119 = scmp.eq.s32.totalorder %s18, 2
      %p120 = scmp.ne.s32.totalorder %s115, %s117
      %p121 = scmp.eq.s32.totalorder %s18, 0
      %p122 = por %p120, %p121
      %p123 = scmp.ne.s32.totalorder %s115, %s117
      %p124 = scmp.eq.s32.totalorder %s23, 2
      %p125 = por %p123, %p124
      %p126 = scmp.ne.s32.totalorder %s117, %s118
      %p127 = scmp.eq.s32.totalorder %s23, 0
      %p128 = por %p126, %p127
      %p129 = scmp.ne.s32.totalorder %s117, %s118
      %p130 = scmp.eq.s32.totalorder %s24, 2
      %p131 = por %p129, %p130
      %p133 = scmp.ne.s32.totalorder %s118, %s132
      %p134 = scmp.eq.s32.totalorder %s24, 0
      %p135 = por %p133, %p134
      %s137 = sadd.s32 %s136, 1
      %p140 = scmp.eq.s32.totalorder %s18, 2
      %p141 = scmp.ne.s32.totalorder %s136, %s138
      %p142 = scmp.eq.s32.totalorder %s18, 0
      %p143 = por %p141, %p142
      %p144 = scmp.ne.s32.totalorder %s136, %s138
      %p145 = scmp.eq.s32.totalorder %s23, 2
      %p146 = por %p144, %p145
      %p147 = scmp.ne.s32.totalorder %s138, %s139
      %p148 = scmp.eq.s32.totalorder %s23, 0
      %p149 = por %p147, %p148
      %p150 = scmp.ne.s32.totalorder %s138, %s139
      %p151 = scmp.eq.s32.totalorder %s24, 2
      %p152 = por %p150, %p151
      %p154 = scmp.ne.s32.totalorder %s139, %s153
      %p155 = scmp.eq.s32.totalorder %s24, 0
      %p156 = por %p154, %p155
      %s158 = sadd.s32 %s157, 1
      %p161 = scmp.eq.s32.totalorder %s18, 2
      %p162 = scmp.ne.s32.totalorder %s157, %s159
      %p163 = scmp.eq.s32.totalorder %s18, 0
      %p164 = por %p162, %p163
      %p165 = scmp.ne.s32.totalorder %s157, %s159
      %p166 = scmp.eq.s32.totalorder %s23, 2
      %p167 = por %p165, %p166
      %p168 = scmp.ne.s32.totalorder %s159, %s160
      %p169 = scmp.eq.s32.totalorder %s23, 0
      %p170 = por %p168, %p169
      %p171 = scmp.ne.s32.totalorder %s159, %s160
      %p172 = scmp.eq.s32.totalorder %s24, 2
      %p173 = por %p171, %p172
      %p175 = scmp.ne.s32.totalorder %s160, %s174
      %p176 = scmp.eq.s32.totalorder %s24, 0
      %p177 = por %p175, %p176
      %s178 = ssub.s32 %s18, %s25
      %p179 = scmp.eq.s32.totalorder %s178, 0
      %s181 = sadd.s32 %s180, 1
      %s182 = scalar_select %p179, %s180, %s181
      %p185 = pneg %p179
      %p186 = scmp.eq.s32.totalorder %s18, 2
      %p187 = por %p185, %p186
      %p188 = scmp.ne.s32.totalorder %s180, %s183
      %p189 = scmp.eq.s32.totalorder %s18, 0
      %p190 = por %p188, %p189
      %p191 = scmp.ne.s32.totalorder %s180, %s183
      %p192 = scmp.eq.s32.totalorder %s23, 2
      %p193 = por %p191, %p192
      %p194 = scmp.ne.s32.totalorder %s183, %s184
      %p195 = scmp.eq.s32.totalorder %s23, 0
      %p196 = por %p194, %p195
      %p197 = scmp.ne.s32.totalorder %s183, %s184
      %p198 = scmp.eq.s32.totalorder %s24, 2
      %p199 = por %p197, %p198
      %p201 = scmp.ne.s32.totalorder %s184, %s200
      %p202 = scmp.eq.s32.totalorder %s24, 0
      %p203 = por %p201, %p202
      %p204 = scmp.le.s32.totalorder 1, %s18
      %p205 = scmp.lt.s32.totalorder %s18, 4
      %p206 = pnand %p204, %p205
      %p207 = pneg %p206
      // Predicated region
      $region9: #{dense_model_forward.1} parent=5 // pred_check
        _
      $region10: #{dense_model_forward.1} parent=5 // pred_check_branch
        %209 = sbr.rel (%p206) target = $region12
      $region11: #{dense_model_forward.1} parent=5 // pred_region
        %s210 = ssub.s32 %s18, 1
        // Predicated region
        $region13: #{dense_model_forward.1} parent=11 // pred_check
          %p211 = pneg %p65
        $region14: #{dense_model_forward.1} parent=11 // pred_check_branch
          %213 = sbr.rel (%p211) target = $region16
        $region15: #{dense_model_forward.1} parent=11 // pred_region
          _
        $region16: #{dense_model_forward.1} parent=11 // pred_fallthru
          _
        // Predicated region
        $region17: #{dense_model_forward.1} parent=11 // pred_check
          %p214 = pneg %p86
        $region18: #{dense_model_forward.1} parent=11 // pred_check_branch
          %216 = sbr.rel (%p214) target = $region20
        $region19: #{dense_model_forward.1} parent=11 // pred_region
          _
        $region20: #{dense_model_forward.1} parent=11 // pred_fallthru
          _
        // Predicated region
        $region21: #{dense_model_forward.1} parent=11 // pred_check
          %p217 = pneg %p107
        $region22: #{dense_model_forward.1} parent=11 // pred_check_branch
          %219 = sbr.rel (%p217) target = $region24
        $region23: #{dense_model_forward.1} parent=11 // pred_region
          _
        $region24: #{dense_model_forward.1} parent=11 // pred_fallthru
          _
        // Predicated region
        $region25: #{dense_model_forward.1} parent=11 // pred_check
          %p220 = pneg %p128
        $region26: #{dense_model_forward.1} parent=11 // pred_check_branch
          %222 = sbr.rel (%p220) target = $region28
        $region27: #{dense_model_forward.1} parent=11 // pred_region
          _
        $region28: #{dense_model_forward.1} parent=11 // pred_fallthru
          _
        // Predicated region
        $region29: #{dense_model_forward.1} parent=11 // pred_check
          %p223 = pneg %p149
        $region30: #{dense_model_forward.1} parent=11 // pred_check_branch
          %225 = sbr.rel (%p223) target = $region32
        $region31: #{dense_model_forward.1} parent=11 // pred_region
          _
        $region32: #{dense_model_forward.1} parent=11 // pred_fallthru
          _
        // Predicated region
        $region33: #{dense_model_forward.1} parent=11 // pred_check
          %p226 = pneg %p170
        $region34: #{dense_model_forward.1} parent=11 // pred_check_branch
          %228 = sbr.rel (%p226) target = $region36
        $region35: #{dense_model_forward.1} parent=11 // pred_region
          _
        $region36: #{dense_model_forward.1} parent=11 // pred_fallthru
          _
      $region12: #{dense_model_forward.1} parent=5 // pred_fallthru
        _
      %p229 = scmp.lt.s32.totalorder %s18, 3
      // Predicated region
      $region37: #{dense_model_forward.1} parent=5 // pred_check
        %p230 = pneg %p229
      $region38: #{dense_model_forward.1} parent=5 // pred_check_branch
        %232 = sbr.rel (%p230) target = $region40
      $region39: #{dense_model_forward.1} parent=5 // pred_region
        // Predicated region
        $region41: #{dense_model_forward.1} parent=39 // pred_check
          %p233 = pneg %p38
        $region42: #{dense_model_forward.1} parent=39 // pred_check_branch
          %235 = sbr.rel (%p233) target = $region44
        $region43: #{dense_model_forward.1} parent=39 // pred_region
          %s236 = sand.u32 %s28, 1
          %s237 = sand.u32 %s28, 1
          %s238 = smul.addr %s237, 8
          %s239 = scalar_lea.vmem [#allocation3], %s238
          %s240 = smul.addr %s18, 4
          %s241 = scalar_lea.vmem %s0, %s240
          // Predicated region
          $region45: #{dense_model_forward.1} parent=43 // pred_check
            _
          $region46: #{dense_model_forward.1} parent=43 // pred_check_branch
            %243 = sbr.rel (0) target = $region48
          $region47: #{dense_model_forward.1} parent=43 // pred_region
            // Predicated region
            $region49: #{dense_model_forward.1} parent=47 // pred_check
              _
            $region50: #{dense_model_forward.1} parent=47 // pred_check_branch
              %245 = sbr.rel target = $region52
            $region51: #{dense_model_forward.1} parent=47 // pred_region
              // Predicated region
              $region64: #{dense_model_forward.1} parent=51 // pred_check
                _
              $region65: #{dense_model_forward.1} parent=51 // pred_check_branch
                %263 = sbr.rel (0) target = $region67
              $region66: #{dense_model_forward.1} parent=51 // pred_region
                loop: start=0, step=1, limit=1
                $region68: #{dense_model_forward.1} parent=66 // loop_pre_header
                  _
                $region69: #{dense_model_forward.1} parent=66 // loop_header
                  %s265 = sphi 0, %s269
                  %p266 = scmp.ge.s32.totalorder %s265, 1
                  %s270 = sphi %s241, %s241
                  %s271 = sphi %s239, %s239
                $region70: #{dense_model_forward.1} parent=66 // loop_header_branch
                  %268 = sbr.rel (%p266) target = $region74
                $region71: #{dense_model_forward.1} parent=66 // loop_body
                  _
                $region72: #{dense_model_forward.1} parent=66 // loop_footer
                  %s269 = sadd.s32 1, %s265
                $region73: #{dense_model_forward.1} parent=66 // loop_footer_branch
                  %264 = sbr.rel target = $region69
                $region74: #{dense_model_forward.1} parent=66 // loop_exit
                  _
                %s273 = ssub.s32 16, 1
                loop: start=0, step=1, limit=1
                $region75: #{dense_model_forward.1} parent=66 // loop_pre_header
                  _
                $region76: #{dense_model_forward.1} parent=66 // loop_header
                  %s275 = sphi 0, %s279
                  %p276 = scmp.ge.s32.totalorder %s275, 1
                  %s280 = sphi %s241, %s241
                  %s281 = sphi %s239, %s239
                $region77: #{dense_model_forward.1} parent=66 // loop_header_branch
                  %278 = sbr.rel (%p276) target = $region81
                $region78: #{dense_model_forward.1} parent=66 // loop_body
                  %v282 = vld [vmem:[%s280] sm:%s273]
                  %283 = vst [vmem:[%s281] sm:%s273] %v282
                  %v284 = vld [vmem:[%s280 + $0xc] sm:%s273]
                  %285 = vst [vmem:[%s281 + $0x4] sm:%s273] %v284
                $region79: #{dense_model_forward.1} parent=66 // loop_footer
                  %s279 = sadd.s32 1, %s275
                $region80: #{dense_model_forward.1} parent=66 // loop_footer_branch
                  %274 = sbr.rel target = $region76
                $region81: #{dense_model_forward.1} parent=66 // loop_exit
                  _
              $region67: #{dense_model_forward.1} parent=51 // pred_fallthru
                _
            $region52: #{dense_model_forward.1} parent=47 // pred_fallthru
              _
            // Predicated region
            $region53: #{dense_model_forward.1} parent=47 // pred_check
              _
            $region54: #{dense_model_forward.1} parent=47 // pred_check_branch
              %247 = sbr.rel (0) target = $region56
            $region55: #{dense_model_forward.1} parent=47 // pred_region
              %s249 = ssub.s32 16, 1
              loop: start=0, step=1, limit=1
              $region57: #{dense_model_forward.1} parent=55 // loop_pre_header
                _
              $region58: #{dense_model_forward.1} parent=55 // loop_header
                %s251 = sphi 0, %s255
                %p252 = scmp.ge.s32.totalorder %s251, 1
                %s256 = sphi %s241, %s241
                %s257 = sphi %s239, %s239
              $region59: #{dense_model_forward.1} parent=55 // loop_header_branch
                %254 = sbr.rel (%p252) target = $region63
              $region60: #{dense_model_forward.1} parent=55 // loop_body
                %v258 = vld [vmem:[%s256] sm:%s249]
                %259 = vst [vmem:[%s257] sm:%s249] %v258
                %v260 = vld [vmem:[%s256 + $0xc] sm:%s249]
                %261 = vst [vmem:[%s257 + $0x4] sm:%s249] %v260
              $region61: #{dense_model_forward.1} parent=55 // loop_footer
                %s255 = sadd.s32 1, %s251
              $region62: #{dense_model_forward.1} parent=55 // loop_footer_branch
                %250 = sbr.rel target = $region58
              $region63: #{dense_model_forward.1} parent=55 // loop_exit
                _
            $region56: #{dense_model_forward.1} parent=47 // pred_fallthru
              _
          $region48: #{dense_model_forward.1} parent=43 // pred_fallthru
            _
          %286 = vnop
        $region44: #{dense_model_forward.1} parent=39 // pred_fallthru
          _
      $region40: #{dense_model_forward.1} parent=5 // pred_fallthru
        _
      %p287 = scmp.le.s32.totalorder 1, %s18
      %p288 = scmp.lt.s32.totalorder %s18, 4
      %p289 = pnand %p287, %p288
      %p290 = pneg %p289
      // Predicated region
      $region82: #{dense_model_forward.1} parent=5 // pred_check
        _
      $region83: #{dense_model_forward.1} parent=5 // pred_check_branch
        %292 = sbr.rel (%p289) target = $region85
      $region84: #{dense_model_forward.1} parent=5 // pred_region
        %s293 = ssub.s32 %s18, 1
        %s294 = sand.u32 %s31, 1
        %s295 = sand.u32 %s31, 1
        %s296 = smul.addr %s295, 8
        %s297 = scalar_lea.vmem [#allocation3], %s296
        // Predicated region
        $region86: #{dense_model_forward.1} parent=84 // pred_check
          %p298 = pneg %p44
        $region87: #{dense_model_forward.1} parent=84 // pred_check_branch
          %300 = sbr.rel (%p298) target = $region89
        $region88: #{dense_model_forward.1} parent=84 // pred_region
          _
        $region89: #{dense_model_forward.1} parent=84 // pred_fallthru
          _
        %s301 = sand.u32 %s31, 1
        %s302 = sand.u32 %s31, 1
        %s303 = smul.addr %s302, 8
        %s304 = scalar_lea.vmem [#allocation3], %s303
        %p305 = pneg %p44
        %p306 = pneg %p41
        %p307 = pneg %p65
        %p308 = pneg %p62
        %p309 = pneg %p86
        %p310 = pneg %p83
        %p311 = pneg %p107
        %p312 = pneg %p104
        %p313 = pneg %p128
        %p314 = pneg %p125
        %p315 = pneg %p149
        %p316 = pneg %p146
        %p317 = pneg %p170
        %p318 = pneg %p167
        %p319 = pneg %p196
        %p320 = pneg %p193
        %s321 = sand.u32 %s183, 1
        %s322 = scalar_lea.sflag [#allocation5], %s321
        %s323 = sand.u32 %s183, 1
        %s324 = scalar_lea.vmem [#allocation4], %s323
        %v326 = vld [vmem:[%s297] sm:$0xf]
        %v327 = vld [vmem:[%s297 + $0x4] sm:$0x1]
        %v328 = vld [vmem:[%s1] sm:$0xf]
        %v329 = vld [vmem:[%s1 + $0x4] sm:$0xf]
        %v330 = vld [vmem:[%s2] sm:$0xff]
        %v331 = vld [vmem:[%s2 + $0x8] sm:$0xff]
        %333 = vset.pattern.permute.xlu0 0
        %334 = vperm.xlu0 %333, %v330
        %v335 = vpop.permute.xlu0 %334
        %338 = vset.pattern.permute.xlu0 0
        %339 = vperm.xlu0 %338, %v331
        %v340 = vpop.permute.xlu0 %339
        %v344 = vunpack.c.l.b16 %v328
        %v345 = vunpack.c.l.b16 %v329
        %v346 = vpack.c.b16 %v345, %v344
        %v349 = vunpack.c.l.b16 %v326
        %v350 = vunpack.c.l.b16 %v327
        %v351 = vpack.c.b16 %v350, %v349
        %vm352 = vcmask 80896
        %v354 = vsel %vm352, %v346, 0
        %vm356 = vcmask 1044480
        %v358 = vsel %vm356, %v351, 0
        %360 = vmatprep.subr.bf16.mxu0 0
        %361 = vmatpush1.bf16.msra.mxu0 0
        %362 = vmatprep.subr.bf16.mxu0 0
        %363 = vmatpush1.bf16.msra.mxu0 0
        %364 = vmatprep.subr.bf16.mxu0 0
        %365 = vmatpush1.bf16.msra.mxu0 0
        %366 = vmatprep.subr.bf16.mxu0 0
        %367 = vmatpush1.bf16.msra.mxu0 0
        %368 = vmatprep.subr.bf16.mxu0 0
        %369 = vmatpush1.bf16.msra.mxu0 0
        %370 = vmatprep.subr.bf16.mxu0 0
        %371 = vmatpush1.bf16.msra.mxu0 0
        %372 = vmatprep.subr.bf16.mxu0 0
        %373 = vmatpush1.bf16.msra.mxu0 0
        %374 = vmatprep.subr.bf16.mxu0 0
        %375 = vmatpush1.bf16.msra.mxu0 %v358
        %376 = vmatprep.subr.bf16.mxu0 0
        %377 = vmatpush2.bf16.msra.mxu0 0
        %378 = vmatprep.subr.bf16.mxu0 0
        %379 = vmatpush2.bf16.msra.mxu0 0
        %380 = vmatprep.subr.bf16.mxu0 0
        %381 = vmatpush2.bf16.msra.mxu0 0
        %382 = vmatprep.subr.bf16.mxu0 0
        %383 = vmatpush2.bf16.msra.mxu0 0
        %384 = vmatprep.subr.bf16.mxu0 0
        %385 = vmatpush2.bf16.msra.mxu0 0
        %386 = vmatprep.subr.bf16.mxu0 0
        %387 = vmatpush2.bf16.msra.mxu0 0
        %388 = vmatprep.subr.bf16.mxu0 0
        %389 = vmatpush2.bf16.msra.mxu0 0
        %390 = vmatprep.subr.bf16.mxu0 0
        %391 = vmatpush2.bf16.msra.mxu0 0
        %392 = vmatprep.mubr.bf16.mxu0 0
        %393 = vmatmul.mubr.bf16.gmra.mxu0 %v354
        %v394 = vpop.f32.mrf.mxu0
        %v395 = vadd.f32 %v335, %v394
        %v396 = vpop.f32.mrf.mxu0
        %v397 = vpop.f32.mrf.mxu0
        %v398 = vadd.f32 %v340, %v397
        %v399 = vpop.f32.mrf.mxu0
        %400 = vdwg.mxu0
        %v401 = vmax.f32 %v395, 0.0
        %v402 = vmax.f32 %v398, 0.0
        %v403 = vld [vmem:[%s3] sm:$0xff]
        %v404 = vld [vmem:[%s3 + $0x8] sm:$0xff]
        %v405 = vld [vmem:[%s3 + $0x10] sm:$0xff]
        %v406 = vld [vmem:[%s3 + $0x18] sm:$0xff]
        %v407 = vld [vmem:[%s4] sm:$0xff]
        %v408 = vld [vmem:[%s4 + $0x8] sm:$0xff]
        %v409 = vld [vmem:[%s4 + $0x10] sm:$0xff]
        %v410 = vld [vmem:[%s4 + $0x18] sm:$0xff]
        %412 = vset.pattern.permute.xlu0 0
        %413 = vperm.xlu0 %412, %v407
        %v414 = vpop.permute.xlu0 %413
        %417 = vset.pattern.permute.xlu0 0
        %418 = vperm.xlu0 %417, %v408
        %v419 = vpop.permute.xlu0 %418
        %422 = vset.pattern.permute.xlu0 0
        %423 = vperm.xlu0 %422, %v409
        %v424 = vpop.permute.xlu0 %423
        %427 = vset.pattern.permute.xlu0 0
        %428 = vperm.xlu0 %427, %v410
        %v429 = vpop.permute.xlu0 %428
        %vm431 = vcmask 130048
        %v433 = vsel %vm431, %v403, 0
        %v436 = vsel %vm431, %v404, 0
        %v439 = vsel %vm431, %v405, 0
        %v442 = vsel %vm431, %v406, 0
        %444 = vmatprep.subr.mxu0 0.0
        %445 = vmatpush1.msra.mxu0 0.0
        %446 = vmatprep.subr.mxu0 0.0
        %447 = vmatpush1.msra.mxu0 0.0
        %448 = vmatprep.subr.mxu0 0.0
        %449 = vmatpush1.msra.mxu0 0.0
        %450 = vmatprep.subr.mxu0 0.0
        %451 = vmatpush1.msra.mxu0 0.0
        %452 = vmatprep.subr.mxu0 0.0
        %453 = vmatpush1.msra.mxu0 0.0
        %454 = vmatprep.subr.mxu0 0.0
        %455 = vmatpush1.msra.mxu0 0.0
        %456 = vmatprep.subr.mxu0 0.0
        %457 = vmatpush1.msra.mxu0 0.0
        %458 = vmatprep.subr.mxu0 0.0
        %459 = vmatpush1.msra.mxu0 0.0
        %460 = vmatprep.subr.mxu0 0.0
        %461 = vmatpush1.msra.mxu0 0.0
        %462 = vmatprep.subr.mxu0 0.0
        %463 = vmatpush1.msra.mxu0 0.0
        %464 = vmatprep.subr.mxu0 0.0
        %465 = vmatpush1.msra.mxu0 0.0
        %466 = vmatprep.subr.mxu0 0.0
        %467 = vmatpush1.msra.mxu0 0.0
        %468 = vmatprep.subr.mxu0 0.0
        %469 = vmatpush1.msra.mxu0 0.0
        %470 = vmatprep.subr.mxu0 0.0
        %471 = vmatpush1.msra.mxu0 0.0
        %472 = vmatprep.subr.mxu0 0.0
        %473 = vmatpush1.msra.mxu0 %v402
        %474 = vmatprep.subr.mxu0 0.0
        %475 = vmatpush1.msra.mxu0 %v401
        %476 = vmatprep.subr.mxu0 0.0
        %477 = vmatpush2.msra.mxu0 0.0
        %478 = vmatprep.subr.mxu0 0.0
        %479 = vmatpush2.msra.mxu0 0.0
        %480 = vmatprep.subr.mxu0 0.0
        %481 = vmatpush2.msra.mxu0 0.0
        %482 = vmatprep.subr.mxu0 0.0
        %483 = vmatpush2.msra.mxu0 0.0
        %484 = vmatprep.subr.mxu0 0.0
        %485 = vmatpush2.msra.mxu0 0.0
        %486 = vmatprep.subr.mxu0 0.0
        %487 = vmatpush2.msra.mxu0 0.0
        %488 = vmatprep.subr.mxu0 0.0
        %489 = vmatpush2.msra.mxu0 0.0
        %490 = vmatprep.subr.mxu0 0.0
        %491 = vmatpush2.msra.mxu0 0.0
        %492 = vmatprep.subr.mxu0 0.0
        %493 = vmatpush2.msra.mxu0 0.0
        %494 = vmatprep.subr.mxu0 0.0
        %495 = vmatpush2.msra.mxu0 0.0
        %496 = vmatprep.subr.mxu0 0.0
        %497 = vmatpush2.msra.mxu0 0.0
        %498 = vmatprep.subr.mxu0 0.0
        %499 = vmatpush2.msra.mxu0 0.0
        %500 = vmatprep.subr.mxu0 0.0
        %501 = vmatpush2.msra.mxu0 0.0
        %502 = vmatprep.subr.mxu0 0.0
        %503 = vmatpush2.msra.mxu0 0.0
        %504 = vmatprep.subr.mxu0 0.0
        %505 = vmatpush2.msra.mxu0 0.0
        %506 = vmatprep.subr.mxu0 0.0
        %507 = vmatpush2.msra.mxu0 0.0
        %508 = vmatprep.mubr.f32.mxu0 0.0
        %509 = vmatmul.mubr.f32.gmra.mxu0 %v433
        %v510 = vpop.f32.mrf.mxu0
        %v511 = vadd.f32 %v414, %v510
        %v512 = vpop.f32.mrf.mxu0
        %513 = vmatprep.mubr.f32.mxu0 0.0
        %514 = vmatmul.mubr.f32.gmra.mxu0 %v436
        %v515 = vpop.f32.mrf.mxu0
        %v516 = vadd.f32 %v419, %v515
        %v517 = vpop.f32.mrf.mxu0
        %518 = vmatprep.mubr.f32.mxu0 0.0
        %519 = vmatmul.mubr.f32.gmra.mxu0 %v439
        %v520 = vpop.f32.mrf.mxu0
        %v521 = vadd.f32 %v424, %v520
        %v522 = vpop.f32.mrf.mxu0
        %523 = vmatprep.mubr.f32.mxu0 0.0
        %524 = vmatmul.mubr.f32.gmra.mxu0 %v442
        %v525 = vpop.f32.mrf.mxu0
        %v526 = vadd.f32 %v429, %v525
        %v527 = vpop.f32.mrf.mxu0
        %528 = vdwg.mxu0
        %v529 = vmax.f32 %v511, 0.0
        %v530 = vmax.f32 %v516, 0.0
        %v531 = vmax.f32 %v521, 0.0
        %v532 = vmax.f32 %v526, 0.0
        %v533 = vld [vmem:[%s5] sm:$0x1]
        %v534 = vld [vmem:[#allocation2] sm:$0x1]
        %536 = vset.pattern.permute.xlu0 0
        %537 = vperm.xlu0 %536, %v534
        %v538 = vpop.permute.xlu0 %537
        %v540 = vlaneseq
        %v541 = vshrl.u32 %v540, 7
        %v542 = vsub.s32 0, %v541
        %v543 = vrot.slane %v538, %v542
        %vm544 = vcmask 261120
        %v546 = vsel %vm544, %v533, 0
        %548 = vmatprep.subr.mxu0 0.0
        %549 = vmatpush1.msra.mxu0 0.0
        %550 = vmatprep.subr.mxu0 0.0
        %551 = vmatpush1.msra.mxu0 0.0
        %552 = vmatprep.subr.mxu0 0.0
        %553 = vmatpush1.msra.mxu0 0.0
        %554 = vmatprep.subr.mxu0 0.0
        %555 = vmatpush1.msra.mxu0 0.0
        %556 = vmatprep.subr.mxu0 0.0
        %557 = vmatpush1.msra.mxu0 0.0
        %558 = vmatprep.subr.mxu0 0.0
        %559 = vmatpush1.msra.mxu0 0.0
        %560 = vmatprep.subr.mxu0 0.0
        %561 = vmatpush1.msra.mxu0 0.0
        %562 = vmatprep.subr.mxu0 0.0
        %563 = vmatpush1.msra.mxu0 0.0
        %564 = vmatprep.subr.mxu0 0.0
        %565 = vmatpush1.msra.mxu0 0.0
        %566 = vmatprep.subr.mxu0 0.0
        %567 = vmatpush1.msra.mxu0 0.0
        %568 = vmatprep.subr.mxu0 0.0
        %569 = vmatpush1.msra.mxu0 0.0
        %570 = vmatprep.subr.mxu0 0.0
        %571 = vmatpush1.msra.mxu0 0.0
        %572 = vmatprep.subr.mxu0 0.0
        %573 = vmatpush1.msra.mxu0 %v532
        %574 = vmatprep.subr.mxu0 0.0
        %575 = vmatpush1.msra.mxu0 %v531
        %576 = vmatprep.subr.mxu0 0.0
        %577 = vmatpush1.msra.mxu0 %v530
        %578 = vmatprep.subr.mxu0 0.0
        %579 = vmatpush1.msra.mxu0 %v529
        %580 = vmatprep.subr.mxu0 0.0
        %581 = vmatpush2.msra.mxu0 0.0
        %582 = vmatprep.subr.mxu0 0.0
        %583 = vmatpush2.msra.mxu0 0.0
        %584 = vmatprep.subr.mxu0 0.0
        %585 = vmatpush2.msra.mxu0 0.0
        %586 = vmatprep.subr.mxu0 0.0
        %587 = vmatpush2.msra.mxu0 0.0
        %588 = vmatprep.subr.mxu0 0.0
        %589 = vmatpush2.msra.mxu0 0.0
        %590 = vmatprep.subr.mxu0 0.0
        %591 = vmatpush2.msra.mxu0 0.0
        %592 = vmatprep.subr.mxu0 0.0
        %593 = vmatpush2.msra.mxu0 0.0
        %594 = vmatprep.subr.mxu0 0.0
        %595 = vmatpush2.msra.mxu0 0.0
        %596 = vmatprep.subr.mxu0 0.0
        %597 = vmatpush2.msra.mxu0 0.0
        %598 = vmatprep.subr.mxu0 0.0
        %599 = vmatpush2.msra.mxu0 0.0
        %600 = vmatprep.subr.mxu0 0.0
        %601 = vmatpush2.msra.mxu0 0.0
        %602 = vmatprep.subr.mxu0 0.0
        %603 = vmatpush2.msra.mxu0 0.0
        %604 = vmatprep.subr.mxu0 0.0
        %605 = vmatpush2.msra.mxu0 0.0
        %606 = vmatprep.subr.mxu0 0.0
        %607 = vmatpush2.msra.mxu0 0.0
        %608 = vmatprep.subr.mxu0 0.0
        %609 = vmatpush2.msra.mxu0 0.0
        %610 = vmatprep.subr.mxu0 0.0
        %611 = vmatpush2.msra.mxu0 0.0
        %612 = vmatprep.mubr.f32.mxu0 0.0
        %613 = vmatmul.mubr.f32.gmra.mxu0 %v546
        %v614 = vpop.f32.mrf.mxu0
        %v615 = vadd.f32 %v543, %v614
        %v616 = vpop.f32.mrf.mxu0
        %617 = vdwg.mxu0
        %618 = vst [vmem:[%s324] sm:$0x1] %v615
        %s619 = sand.u32 %s183, 1
        %s620 = scalar_lea.sflag [#allocation5], %s619
        %s621 = sand.u32 %s183, 1
        %s622 = scalar_lea.vmem [#allocation4], %s621
        // Predicated region
        $region90: #{dense_model_forward.1} parent=84 // pred_check
          %p623 = pneg %p193
        $region91: #{dense_model_forward.1} parent=84 // pred_check_branch
          %625 = sbr.rel (%p623) target = $region93
        $region92: #{dense_model_forward.1} parent=84 // pred_region
          %s627 = ssub.s32 16, 16
          %628 = vsyncadd %s620, %s627
          %s629 = smul.addr %s23, 16
          %s630 = scalar_lea.hbm %s7, %s629
          %s632 = sshll.u32 %s622, 4
          %s633 = int_to_ptr.vmem [resolvable:$true] %s632
          %635 = dma.vmem_to_hbm [thread:$0]  %s633, 16, %s630, %s620
        $region93: #{dense_model_forward.1} parent=84 // pred_fallthru
          _
      $region85: #{dense_model_forward.1} parent=5 // pred_fallthru
        _
      %p636 = scmp.le.s32.totalorder 2, %s18
      // Predicated region
      $region94: #{dense_model_forward.1} parent=5 // pred_check
        %p637 = pneg %p636
      $region95: #{dense_model_forward.1} parent=5 // pred_check_branch
        %639 = sbr.rel (%p637) target = $region97
      $region96: #{dense_model_forward.1} parent=5 // pred_region
        %s640 = ssub.s32 %s18, 2
        // Predicated region
        $region98: #{dense_model_forward.1} parent=96 // pred_check
          %p641 = pneg %p199
        $region99: #{dense_model_forward.1} parent=96 // pred_check_branch
          %643 = sbr.rel (%p641) target = $region101
        $region100: #{dense_model_forward.1} parent=96 // pred_region
          %s644 = sand.u32 %s184, 1
          %s645 = scalar_lea.sflag [#allocation5], %s644
          %s646 = sand.u32 %s184, 1
          %s647 = scalar_lea.vmem [#allocation4], %s646
          %648 = dma.done %s645, 16
        $region101: #{dense_model_forward.1} parent=96 // pred_fallthru
          _
      $region97: #{dense_model_forward.1} parent=5 // pred_fallthru
        _
    $region6: #{dense_model_forward.1} parent=1 // loop_footer
      %s22 = sadd.s32 1, %s18
    $region7: #{dense_model_forward.1} parent=1 // loop_footer_branch
      %17 = sbr.rel target = $region3
    $region8: #{dense_model_forward.1} parent=1 // loop_exit
      _
    %649 = vsyncpa [#allocation5], 1
    %s650 = scalar_lea.sflag [#allocation5], 1
    %651 = vsyncpa %s650, 1

</llo_original>
